<compile_context>
chip_gen: v5e
topology: v5e:2x2
jax: 0.10.0
libtpu: 0.0.40
codegen_flags: <defaults>
</compile_context>

<pallas_src>
import functools

import jax
import jax.numpy as jnp
import numpy as np
from jax.experimental import pallas as pl
from jax.experimental.pallas import tpu as pltpu

IN_CHANNELS = 1
PATCH_SIZE = 20
EMBED_DIM = 400

_VMEM = pl.BlockSpec(memory_space=pltpu.MemorySpace.VMEM)


# ------------------------------ Pallas kernel ------------------------------

def patch_embed_kernel(p_ref, w_ref, b_ref, out_ref):
    """p_ref: (M, K) bf16 patches; w_ref: (E, K) bf16; b_ref: (1, E) f32; out: (M, E) f32."""
    acc = jax.lax.dot_general(
        p_ref[...], w_ref[...],
        dimension_numbers=(((1,), (1,)), ((), ())),   # patches @ weight.T on the MXU
        preferred_element_type=jnp.float32)           # f32 accumulation
    out_ref[...] = acc + b_ref[...]


# ------------------------- parameter init (one-time) ------------------------

def init_patch_embedding_params(conv_w, conv_b):
    """One-time prep (mirrors nn.Module.__init__): no per-call transpose or cast."""
    E = conv_w.shape[0]
    K = conv_w.shape[1] * conv_w.shape[2] * conv_w.shape[3]
    w_ek = jnp.asarray(conv_w).reshape(E, K).astype(jnp.bfloat16)   # natural (E, K) layout
    b_row = jnp.asarray(conv_b).reshape(1, E).astype(jnp.float32)
    return w_ek, b_row


# ------------------------------ forward (per call) ---------------------------

@functools.partial(jax.jit, static_argnames=("patch_size",))
def patch_embedding_forward(x, w_ek, b_row, *, patch_size=PATCH_SIZE):
    """x: (B, C, H, W) f32.  Returns flatten(conv(x), 1, 2).permute(0, 2, 1) -> (B, Wp, E*Hp)."""
    B, C, H, W = x.shape
    P = patch_size
    assert H % P == 0 and W % P == 0, (H, W, P)
    Hp, Wp = H // P, W // P
    E, K = w_ek.shape
    assert K == C * P * P, (K, C, P)
    M = B * Hp * Wp

    # im2col for non-overlapping patches: pure layout, zero FLOPs.  Under jit
    # XLA fuses it (plus the bf16 cast) into one small copy feeding the call.
    # k ordering is (c, pr, pc), matching conv_w.reshape(E, K).
    patches = x.reshape(B, C, Hp, P, Wp, P).transpose(0, 2, 4, 1, 3, 5)
    patches = patches.reshape(M, K).astype(jnp.bfloat16)

    out = pl.pallas_call(
        patch_embed_kernel,
        out_shape=jax.ShapeDtypeStruct((M, E), jnp.float32),
        in_specs=[_VMEM, _VMEM, _VMEM],
        out_specs=_VMEM,
        cost_estimate=pl.CostEstimate(
            flops=2 * M * K * E,
            transcendentals=0,
            bytes_accessed=M * K * 2 + E * K * 2 + E * 4 + M * E * 4),
    )(patches, w_ek, b_row)

    # Conv output is (B, E, Hp, Wp); PyTorch flatten(1,2)+permute(0,2,1) gives
    # result[b, wp, e*Hp + hp] = conv[b, e, hp, wp].
    if Hp == 1:
        return out.reshape(B, Wp, E)              # permute is a no-op: skip the copy
    out = out.reshape(B, Hp, Wp, E).transpose(0, 2, 3, 1)   # (B, Wp, E, Hp)
    return out.reshape(B, Wp, E * Hp)


# --------------------------------- main -------------------------------------

if __name__ == "__main__":
    key = jax.random.PRNGKey(0)
    kx, kw, kb = jax.random.split(key, 3)

    # OCR-strip-like input: height == patch_size (Hp = 1), 8 patches wide.
    B, C, H, W = 2, IN_CHANNELS, PATCH_SIZE, 8 * PATCH_SIZE
    P = PATCH_SIZE
    x = jax.random.normal(kx, (B, C, H, W), jnp.float32)
    conv_w = 0.02 * jax.random.normal(kw, (EMBED_DIM, C, P, P), jnp.float32)
    conv_b = 0.02 * jax.random.normal(kb, (EMBED_DIM,), jnp.float32)

    w_ek, b_row = init_patch_embedding_params(conv_w, conv_b)
    out = patch_embedding_forward(x, w_ek, b_row, patch_size=P)
    out = jax.block_until_ready(out)

    Hp, Wp = H // P, W // P
    assert out.shape == (B, Wp, EMBED_DIM * Hp), out.shape
    out_np = np.asarray(out).astype(np.float64)
    assert np.all(np.isfinite(out_np))

    xn = np.asarray(x).astype(np.float64)
    wn = np.asarray(conv_w).astype(np.float64)
    bn = np.asarray(conv_b).astype(np.float64)

    # Reference 1: exact float64 strided Conv2d + flatten(1,2) + permute(0,2,1)
    # (independent implementation of the PyTorch semantics, no XLA precision
    # ambiguity).  bf16 operands / f32 accumulation bound the kernel's absolute
    # error to well under 5e-2 here; a layout bug would be O(0.5).
    conv = np.zeros((B, EMBED_DIM, Hp, Wp), np.float64)
    for hp in range(Hp):
        for wp in range(Wp):
            patch = xn[:, :, hp * P:(hp + 1) * P, wp * P:(wp + 1) * P]   # (B, C, P, P)
            conv[:, :, hp, wp] = np.einsum('bcij,ecij->be', patch, wn) + bn
    ref = conv.reshape(B, EMBED_DIM * Hp, Wp).transpose(0, 2, 1)
    err_vs_conv = float(np.max(np.abs(out_np - ref)))
    assert err_vs_conv < 5e-2, err_vs_conv

    # Reference 2 (tight): identical bf16-rounded operands, float64 accumulation.
    # Only the kernel's f32-accumulation rounding remains (< 1e-4).
    patches_np = xn.reshape(B, C, Hp, P, Wp, P).transpose(0, 2, 4, 1, 3, 5)
    patches_np = patches_np.reshape(B * Hp * Wp, C * P * P)
    p_bf = np.asarray(jnp.asarray(patches_np, jnp.float32)
                      .astype(jnp.bfloat16).astype(jnp.float32)).astype(np.float64)
    w_bf = np.asarray(w_ek.astype(jnp.float32)).astype(np.float64)
    ref2 = p_bf @ w_bf.T + np.asarray(b_row).astype(np.float64)
    ref2 = ref2.reshape(B, Hp, Wp, EMBED_DIM).transpose(0, 2, 3, 1)
    ref2 = ref2.reshape(B, Wp, EMBED_DIM * Hp)
    err_same_inputs = float(np.max(np.abs(out_np - ref2)))
    assert err_same_inputs < 1e-3, err_same_inputs

    print("KERNEL_OK")
</pallas_src>

<mosaic_0001>
module attributes {stable_mosaic.version = 11 : i64} {
  func.func @patch_embed_kernel(%arg0: memref<16x400xbf16, #tpu.memory_space<vmem>>, %arg1: memref<400x400xbf16, #tpu.memory_space<vmem>>, %arg2: memref<1x400xf32, #tpu.memory_space<vmem>>, %arg3: memref<16x400xf32, #tpu.memory_space<vmem>>) attributes {dimension_semantics = [], scalar_prefetch = 0 : i64, scratch_operands = 0 : i64, tpu.core_type = #tpu.core_type<tc>} {
    %c0 = arith.constant 0 : index
    %c0_0 = arith.constant 0 : index
    %0 = vector.load %arg0[%c0, %c0_0] : memref<16x400xbf16, #tpu.memory_space<vmem>>, vector<16x400xbf16>
    %c0_1 = arith.constant 0 : index
    %c0_2 = arith.constant 0 : index
    %1 = vector.load %arg1[%c0_1, %c0_2] : memref<400x400xbf16, #tpu.memory_space<vmem>>, vector<400x400xbf16>
    %cst = arith.constant dense<0.000000e+00> : vector<16x400xf32>
    %2 = tpu.matmul %0, %1, %cst {dimension_numbers = #tpu.dot_dimension_numbers<[1], [1], [0], [0], [0, 0, 1, 0], [], []>} : vector<16x400xbf16>, vector<400x400xbf16>, vector<16x400xf32> -> vector<16x400xf32>
    %c0_3 = arith.constant 0 : index
    %c0_4 = arith.constant 0 : index
    %3 = vector.load %arg2[%c0_3, %c0_4] : memref<1x400xf32, #tpu.memory_space<vmem>>, vector<1x400xf32>
    %4 = vector.broadcast %3 : vector<1x400xf32> to vector<16x400xf32>
    %5 = arith.addf %2, %4 : vector<16x400xf32>
    %c0_5 = arith.constant 0 : index
    %c0_6 = arith.constant 0 : index
    %6 = vector.load %arg3[%c0_5, %c0_6] : memref<16x400xf32, #tpu.memory_space<vmem>>, vector<16x400xf32>
    tpu.vector_store %arg3[%c0_5, %c0_6], %5 {strides = array<i32>} : memref<16x400xf32, #tpu.memory_space<vmem>>, vector<16x400xf32>,
    return
  }
}

</mosaic_0001>

<llo_original>
// kernel: patch_embedding_forward.1
$region0: #{patch_embedding_forward.1}
  #allocation0 [shape = 'u32[]', space=smem, size = 0x4, offset = 0x4, fixed_abs, tag = 'smem constant byte address 0x4 - core index']
  #allocation1 [shape = 'u32[72,128]{1,0:T(1,128)}', space=vmem, size = 0x9000, scoped, tag = 'internal scratch']
  %s0 = inlined_call_operand.vmem [shape: bf16[16,400], index: 0, kind: input, shape index: {}]
  %s1 = inlined_call_operand.vmem [shape: bf16[400,400], index: 1, kind: input, shape index: {}]
  %s2 = inlined_call_operand.vmem [shape: f32[1,400], index: 2, kind: input, shape index: {}]
  %s3 = inlined_call_operand.hbm [shape: f32[16,400], index: 3, kind: output, shape index: {}]
  %s4 = sld [smem:[#allocation0]]
  $region22: #{patch_embedding_forward.1} parent=0
    _
  %s6 = ssub.s32 1, %s4
  %s7 = scalar_select 0, %s6, %s4
  $region1: #{patch_embedding_forward.1} parent=0
    #allocation2 [shape = 'u8[32768]{0}', space=vmem, size = 0x8000, scoped, tag = 'output window, operand 0, single buffered']
    #allocation3 [shape = 's32[1]{0}', space=sflag, size = 0x4, scoped, tag = 'scoped memory for patch_embedding_forward.1']
    %8 = vsyncpa [#allocation3], 0
    // Predicated region
    $region2: #{patch_embedding_forward.1} parent=1 // pred_check
      _
    $region3: #{patch_embedding_forward.1} parent=1 // pred_check_branch
      %10 = sbr.rel (0) target = $region5
    $region4: #{patch_embedding_forward.1} parent=1 // pred_region
      _
    $region5: #{patch_embedding_forward.1} parent=1 // pred_fallthru
      _
    // Predicated region
    $region6: #{patch_embedding_forward.1} parent=1 // pred_check
      _
    $region7: #{patch_embedding_forward.1} parent=1 // pred_check_branch
      %12 = sbr.rel (0) target = $region9
    $region8: #{patch_embedding_forward.1} parent=1 // pred_region
      _
    $region9: #{patch_embedding_forward.1} parent=1 // pred_fallthru
      _
    // Predicated region
    $region10: #{patch_embedding_forward.1} parent=1 // pred_check
      _
    $region11: #{patch_embedding_forward.1} parent=1 // pred_check_branch
      %14 = sbr.rel (0) target = $region13
    $region12: #{patch_embedding_forward.1} parent=1 // pred_region
      _
    $region13: #{patch_embedding_forward.1} parent=1 // pred_fallthru
      _
    %v16 = vld [vmem:[%s0] sm:$0xff]
    %v17 = vld [vmem:[%s0 + $0x8] sm:$0xff]
    %v18 = vld [vmem:[%s0 + $0x10] sm:$0xff]
    %v19 = vld [vmem:[%s0 + $0x18] sm:$0xff]
    %v20 = vld [vmem:[%s1] sm:$0xff]
    %v21 = vld [vmem:[%s1 + $0x8] sm:$0xff]
    %v22 = vld [vmem:[%s1 + $0x10] sm:$0xff]
    %v23 = vld [vmem:[%s1 + $0x18] sm:$0xff]
    %v24 = vld [vmem:[%s1 + $0x20] sm:$0xff]
    %v25 = vld [vmem:[%s1 + $0x28] sm:$0xff]
    %v26 = vld [vmem:[%s1 + $0x30] sm:$0xff]
    %v27 = vld [vmem:[%s1 + $0x38] sm:$0xff]
    %v28 = vld [vmem:[%s1 + $0x40] sm:$0xff]
    %v29 = vld [vmem:[%s1 + $0x48] sm:$0xff]
    %v30 = vld [vmem:[%s1 + $0x50] sm:$0xff]
    %v31 = vld [vmem:[%s1 + $0x58] sm:$0xff]
    %v32 = vld [vmem:[%s1 + $0x60] sm:$0xff]
    %v33 = vld [vmem:[%s1 + $0x68] sm:$0xff]
    %v34 = vld [vmem:[%s1 + $0x70] sm:$0xff]
    %v35 = vld [vmem:[%s1 + $0x78] sm:$0xff]
    %v36 = vld [vmem:[%s1 + $0x80] sm:$0xff]
    %v37 = vld [vmem:[%s1 + $0x88] sm:$0xff]
    %v38 = vld [vmem:[%s1 + $0x90] sm:$0xff]
    %v39 = vld [vmem:[%s1 + $0x98] sm:$0xff]
    %v40 = vld [vmem:[%s1 + $0xa0] sm:$0xff]
    %v41 = vld [vmem:[%s1 + $0xa8] sm:$0xff]
    %v42 = vld [vmem:[%s1 + $0xb0] sm:$0xff]
    %v43 = vld [vmem:[%s1 + $0xb8] sm:$0xff]
    %v44 = vld [vmem:[%s1 + $0xc0] sm:$0xff]
    %v45 = vld [vmem:[%s1 + $0xc8] sm:$0xff]
    %v46 = vld [vmem:[%s1 + $0xd0] sm:$0xff]
    %v47 = vld [vmem:[%s1 + $0xd8] sm:$0xff]
    %v48 = vld [vmem:[%s1 + $0xe0] sm:$0xff]
    %v49 = vld [vmem:[%s1 + $0xe8] sm:$0xff]
    %v50 = vld [vmem:[%s1 + $0xf0] sm:$0xff]
    %v51 = vld [vmem:[%s1 + $0xf8] sm:$0xff]
    %v52 = vld [vmem:[%s1 + $0x100] sm:$0xff]
    %v53 = vld [vmem:[%s1 + $0x108] sm:$0xff]
    %v54 = vld [vmem:[%s1 + $0x110] sm:$0xff]
    %v55 = vld [vmem:[%s1 + $0x118] sm:$0xff]
    %v56 = vld [vmem:[%s1 + $0x120] sm:$0xff]
    %v57 = vld [vmem:[%s1 + $0x128] sm:$0xff]
    %v58 = vld [vmem:[%s1 + $0x130] sm:$0xff]
    %v59 = vld [vmem:[%s1 + $0x138] sm:$0xff]
    %v60 = vld [vmem:[%s1 + $0x140] sm:$0xff]
    %v61 = vld [vmem:[%s1 + $0x148] sm:$0xff]
    %v62 = vld [vmem:[%s1 + $0x150] sm:$0xff]
    %v63 = vld [vmem:[%s1 + $0x158] sm:$0xff]
    %v64 = vld [vmem:[%s1 + $0x160] sm:$0xff]
    %v65 = vld [vmem:[%s1 + $0x168] sm:$0xff]
    %v66 = vld [vmem:[%s1 + $0x170] sm:$0xff]
    %v67 = vld [vmem:[%s1 + $0x178] sm:$0xff]
    %v68 = vld [vmem:[%s1 + $0x180] sm:$0xff]
    %v69 = vld [vmem:[%s1 + $0x188] sm:$0xff]
    %v70 = vld [vmem:[%s1 + $0x190] sm:$0xff]
    %v71 = vld [vmem:[%s1 + $0x198] sm:$0xff]
    %v72 = vld [vmem:[%s1 + $0x1a0] sm:$0xff]
    %v73 = vld [vmem:[%s1 + $0x1a8] sm:$0xff]
    %v74 = vld [vmem:[%s1 + $0x1b0] sm:$0xff]
    %v75 = vld [vmem:[%s1 + $0x1b8] sm:$0xff]
    %v76 = vld [vmem:[%s1 + $0x1c0] sm:$0xff]
    %v77 = vld [vmem:[%s1 + $0x1c8] sm:$0xff]
    %v78 = vld [vmem:[%s1 + $0x1d0] sm:$0xff]
    %v79 = vld [vmem:[%s1 + $0x1d8] sm:$0xff]
    %v80 = vld [vmem:[%s1 + $0x1e0] sm:$0xff]
    %v81 = vld [vmem:[%s1 + $0x1e8] sm:$0xff]
    %v82 = vld [vmem:[%s1 + $0x1f0] sm:$0xff]
    %v83 = vld [vmem:[%s1 + $0x1f8] sm:$0xff]
    %v84 = vld [vmem:[%s1 + $0x200] sm:$0xff]
    %v85 = vld [vmem:[%s1 + $0x208] sm:$0xff]
    %v86 = vld [vmem:[%s1 + $0x210] sm:$0xff]
    %v87 = vld [vmem:[%s1 + $0x218] sm:$0xff]
    %v88 = vld [vmem:[%s1 + $0x220] sm:$0xff]
    %v89 = vld [vmem:[%s1 + $0x228] sm:$0xff]
    %v90 = vld [vmem:[%s1 + $0x230] sm:$0xff]
    %v91 = vld [vmem:[%s1 + $0x238] sm:$0xff]
    %v92 = vld [vmem:[%s1 + $0x240] sm:$0xff]
    %v93 = vld [vmem:[%s1 + $0x248] sm:$0xff]
    %v94 = vld [vmem:[%s1 + $0x250] sm:$0xff]
    %v95 = vld [vmem:[%s1 + $0x258] sm:$0xff]
    %v96 = vld [vmem:[%s1 + $0x260] sm:$0xff]
    %v97 = vld [vmem:[%s1 + $0x268] sm:$0xff]
    %v98 = vld [vmem:[%s1 + $0x270] sm:$0xff]
    %v99 = vld [vmem:[%s1 + $0x278] sm:$0xff]
    %v100 = vld [vmem:[%s1 + $0x280] sm:$0xff]
    %v101 = vld [vmem:[%s1 + $0x288] sm:$0xff]
    %v102 = vld [vmem:[%s1 + $0x290] sm:$0xff]
    %v103 = vld [vmem:[%s1 + $0x298] sm:$0xff]
    %v104 = vld [vmem:[%s1 + $0x2a0] sm:$0xff]
    %v105 = vld [vmem:[%s1 + $0x2a8] sm:$0xff]
    %v106 = vld [vmem:[%s1 + $0x2b0] sm:$0xff]
    %v107 = vld [vmem:[%s1 + $0x2b8] sm:$0xff]
    %v108 = vld [vmem:[%s1 + $0x2c0] sm:$0xff]
    %v109 = vld [vmem:[%s1 + $0x2c8] sm:$0xff]
    %v110 = vld [vmem:[%s1 + $0x2d0] sm:$0xff]
    %v111 = vld [vmem:[%s1 + $0x2d8] sm:$0xff]
    %v112 = vld [vmem:[%s1 + $0x2e0] sm:$0xff]
    %v113 = vld [vmem:[%s1 + $0x2e8] sm:$0xff]
    %v114 = vld [vmem:[%s1 + $0x2f0] sm:$0xff]
    %v115 = vld [vmem:[%s1 + $0x2f8] sm:$0xff]
    %v116 = vld [vmem:[%s1 + $0x300] sm:$0xff]
    %v117 = vld [vmem:[%s1 + $0x308] sm:$0xff]
    %v118 = vld [vmem:[%s1 + $0x310] sm:$0xff]
    %v119 = vld [vmem:[%s1 + $0x318] sm:$0xff]
    %v120 = vld [vmem:[%s2] sm:$0xf]
    %v122 = vperm.slane %v120, 0
    %v123 = vperm.slane %v120, 1
    %v124 = vperm.slane %v120, 2
    %v125 = vperm.slane %v120, 3
    %v134 = vunpack.c.l.b16 %v16
    %v135 = vunpack.c.h.b16 %v16
    %v136 = vunpack.c.l.b16 %v17
    %v137 = vunpack.c.h.b16 %v17
    %v138 = vunpack.c.l.b16 %v18
    %v139 = vunpack.c.h.b16 %v18
    %v140 = vunpack.c.l.b16 %v19
    %v141 = vunpack.c.h.b16 %v19
    %v142 = vpack.c.b16 %v138, %v134
    %v143 = vpack.c.b16 %v139, %v135
    %v144 = vpack.c.b16 %v140, %v136
    %v145 = vpack.c.b16 %v141, %v137
    %v249 = vunpack.c.l.b16 %v20
    %v250 = vunpack.c.h.b16 %v20
    %v251 = vunpack.c.l.b16 %v21
    %v252 = vunpack.c.h.b16 %v21
    %v253 = vunpack.c.l.b16 %v22
    %v254 = vunpack.c.h.b16 %v22
    %v255 = vunpack.c.l.b16 %v23
    %v256 = vunpack.c.h.b16 %v23
    %v257 = vunpack.c.l.b16 %v24
    %v258 = vunpack.c.h.b16 %v24
    %v259 = vunpack.c.l.b16 %v25
    %v260 = vunpack.c.h.b16 %v25
    %v261 = vunpack.c.l.b16 %v26
    %v262 = vunpack.c.h.b16 %v26
    %v263 = vunpack.c.l.b16 %v27
    %v264 = vunpack.c.h.b16 %v27
    %v265 = vunpack.c.l.b16 %v28
    %v266 = vunpack.c.h.b16 %v28
    %v267 = vunpack.c.l.b16 %v29
    %v268 = vunpack.c.h.b16 %v29
    %v269 = vunpack.c.l.b16 %v30
    %v270 = vunpack.c.h.b16 %v30
    %v271 = vunpack.c.l.b16 %v31
    %v272 = vunpack.c.h.b16 %v31
    %v273 = vunpack.c.l.b16 %v32
    %v274 = vunpack.c.h.b16 %v32
    %v275 = vunpack.c.l.b16 %v33
    %v276 = vunpack.c.h.b16 %v33
    %v277 = vunpack.c.l.b16 %v34
    %v278 = vunpack.c.h.b16 %v34
    %v279 = vunpack.c.l.b16 %v35
    %v280 = vunpack.c.h.b16 %v35
    %v281 = vunpack.c.l.b16 %v36
    %v282 = vunpack.c.h.b16 %v36
    %v283 = vunpack.c.l.b16 %v37
    %v284 = vunpack.c.h.b16 %v37
    %v285 = vunpack.c.l.b16 %v38
    %v286 = vunpack.c.h.b16 %v38
    %v287 = vunpack.c.l.b16 %v39
    %v288 = vunpack.c.h.b16 %v39
    %v289 = vunpack.c.l.b16 %v40
    %v290 = vunpack.c.h.b16 %v40
    %v291 = vunpack.c.l.b16 %v41
    %v292 = vunpack.c.h.b16 %v41
    %v293 = vunpack.c.l.b16 %v42
    %v294 = vunpack.c.h.b16 %v42
    %v295 = vunpack.c.l.b16 %v43
    %v296 = vunpack.c.h.b16 %v43
    %v297 = vunpack.c.l.b16 %v44
    %v298 = vunpack.c.h.b16 %v44
    %v299 = vunpack.c.l.b16 %v45
    %v300 = vunpack.c.h.b16 %v45
    %v301 = vunpack.c.l.b16 %v46
    %v302 = vunpack.c.h.b16 %v46
    %v303 = vunpack.c.l.b16 %v47
    %v304 = vunpack.c.h.b16 %v47
    %v305 = vunpack.c.l.b16 %v48
    %v306 = vunpack.c.h.b16 %v48
    %v307 = vunpack.c.l.b16 %v49
    %v308 = vunpack.c.h.b16 %v49
    %v309 = vunpack.c.l.b16 %v50
    %v310 = vunpack.c.h.b16 %v50
    %v311 = vunpack.c.l.b16 %v51
    %v312 = vunpack.c.h.b16 %v51
    %v313 = vunpack.c.l.b16 %v52
    %v314 = vunpack.c.h.b16 %v52
    %v315 = vunpack.c.l.b16 %v53
    %v316 = vunpack.c.h.b16 %v53
    %v317 = vunpack.c.l.b16 %v54
    %v318 = vunpack.c.h.b16 %v54
    %v319 = vunpack.c.l.b16 %v55
    %v320 = vunpack.c.h.b16 %v55
    %v321 = vunpack.c.l.b16 %v56
    %v322 = vunpack.c.h.b16 %v56
    %v323 = vunpack.c.l.b16 %v57
    %v324 = vunpack.c.h.b16 %v57
    %v325 = vunpack.c.l.b16 %v58
    %v326 = vunpack.c.h.b16 %v58
    %v327 = vunpack.c.l.b16 %v59
    %v328 = vunpack.c.h.b16 %v59
    %v329 = vunpack.c.l.b16 %v60
    %v330 = vunpack.c.h.b16 %v60
    %v331 = vunpack.c.l.b16 %v61
    %v332 = vunpack.c.h.b16 %v61
    %v333 = vunpack.c.l.b16 %v62
    %v334 = vunpack.c.h.b16 %v62
    %v335 = vunpack.c.l.b16 %v63
    %v336 = vunpack.c.h.b16 %v63
    %v337 = vunpack.c.l.b16 %v64
    %v338 = vunpack.c.h.b16 %v64
    %v339 = vunpack.c.l.b16 %v65
    %v340 = vunpack.c.h.b16 %v65
    %v341 = vunpack.c.l.b16 %v66
    %v342 = vunpack.c.h.b16 %v66
    %v343 = vunpack.c.l.b16 %v67
    %v344 = vunpack.c.h.b16 %v67
    %v345 = vunpack.c.l.b16 %v68
    %v346 = vunpack.c.h.b16 %v68
    %v347 = vunpack.c.l.b16 %v69
    %v348 = vunpack.c.h.b16 %v69
    %v349 = vunpack.c.l.b16 %v70
    %v350 = vunpack.c.h.b16 %v70
    %v351 = vunpack.c.l.b16 %v71
    %v352 = vunpack.c.h.b16 %v71
    %v353 = vunpack.c.l.b16 %v72
    %v354 = vunpack.c.h.b16 %v72
    %v355 = vunpack.c.l.b16 %v73
    %v356 = vunpack.c.h.b16 %v73
    %v357 = vunpack.c.l.b16 %v74
    %v358 = vunpack.c.h.b16 %v74
    %v359 = vunpack.c.l.b16 %v75
    %v360 = vunpack.c.h.b16 %v75
    %v361 = vunpack.c.l.b16 %v76
    %v362 = vunpack.c.h.b16 %v76
    %v363 = vunpack.c.l.b16 %v77
    %v364 = vunpack.c.h.b16 %v77
    %v365 = vunpack.c.l.b16 %v78
    %v366 = vunpack.c.h.b16 %v78
    %v367 = vunpack.c.l.b16 %v79
    %v368 = vunpack.c.h.b16 %v79
    %v369 = vunpack.c.l.b16 %v80
    %v370 = vunpack.c.h.b16 %v80
    %v371 = vunpack.c.l.b16 %v81
    %v372 = vunpack.c.h.b16 %v81
    %v373 = vunpack.c.l.b16 %v82
    %v374 = vunpack.c.h.b16 %v82
    %v375 = vunpack.c.l.b16 %v83
    %v376 = vunpack.c.h.b16 %v83
    %v377 = vunpack.c.l.b16 %v84
    %v378 = vunpack.c.h.b16 %v84
    %v379 = vunpack.c.l.b16 %v85
    %v380 = vunpack.c.h.b16 %v85
    %v381 = vunpack.c.l.b16 %v86
    %v382 = vunpack.c.h.b16 %v86
    %v383 = vunpack.c.l.b16 %v87
    %v384 = vunpack.c.h.b16 %v87
    %v385 = vunpack.c.l.b16 %v88
    %v386 = vunpack.c.h.b16 %v88
    %v387 = vunpack.c.l.b16 %v89
    %v388 = vunpack.c.h.b16 %v89
    %v389 = vunpack.c.l.b16 %v90
    %v390 = vunpack.c.h.b16 %v90
    %v391 = vunpack.c.l.b16 %v91
    %v392 = vunpack.c.h.b16 %v91
    %v393 = vunpack.c.l.b16 %v92
    %v394 = vunpack.c.h.b16 %v92
    %v395 = vunpack.c.l.b16 %v93
    %v396 = vunpack.c.h.b16 %v93
    %v397 = vunpack.c.l.b16 %v94
    %v398 = vunpack.c.h.b16 %v94
    %v399 = vunpack.c.l.b16 %v95
    %v400 = vunpack.c.h.b16 %v95
    %v401 = vunpack.c.l.b16 %v96
    %v402 = vunpack.c.h.b16 %v96
    %v403 = vunpack.c.l.b16 %v97
    %v404 = vunpack.c.h.b16 %v97
    %v405 = vunpack.c.l.b16 %v98
    %v406 = vunpack.c.h.b16 %v98
    %v407 = vunpack.c.l.b16 %v99
    %v408 = vunpack.c.h.b16 %v99
    %v409 = vunpack.c.l.b16 %v100
    %v410 = vunpack.c.h.b16 %v100
    %v411 = vunpack.c.l.b16 %v101
    %v412 = vunpack.c.h.b16 %v101
    %v413 = vunpack.c.l.b16 %v102
    %v414 = vunpack.c.h.b16 %v102
    %v415 = vunpack.c.l.b16 %v103
    %v416 = vunpack.c.h.b16 %v103
    %v417 = vunpack.c.l.b16 %v104
    %v418 = vunpack.c.h.b16 %v104
    %v419 = vunpack.c.l.b16 %v105
    %v420 = vunpack.c.h.b16 %v105
    %v421 = vunpack.c.l.b16 %v106
    %v422 = vunpack.c.h.b16 %v106
    %v423 = vunpack.c.l.b16 %v107
    %v424 = vunpack.c.h.b16 %v107
    %v425 = vunpack.c.l.b16 %v108
    %v426 = vunpack.c.h.b16 %v108
    %v427 = vunpack.c.l.b16 %v109
    %v428 = vunpack.c.h.b16 %v109
    %v429 = vunpack.c.l.b16 %v110
    %v430 = vunpack.c.h.b16 %v110
    %v431 = vunpack.c.l.b16 %v111
    %v432 = vunpack.c.h.b16 %v111
    %v433 = vunpack.c.l.b16 %v112
    %v434 = vunpack.c.h.b16 %v112
    %v435 = vunpack.c.l.b16 %v113
    %v436 = vunpack.c.h.b16 %v113
    %v437 = vunpack.c.l.b16 %v114
    %v438 = vunpack.c.h.b16 %v114
    %v439 = vunpack.c.l.b16 %v115
    %v440 = vunpack.c.h.b16 %v115
    %v441 = vunpack.c.l.b16 %v116
    %v442 = vunpack.c.h.b16 %v116
    %v443 = vunpack.c.l.b16 %v117
    %v444 = vunpack.c.h.b16 %v117
    %v445 = vunpack.c.l.b16 %v118
    %v446 = vunpack.c.h.b16 %v118
    %v447 = vunpack.c.l.b16 %v119
    %v448 = vunpack.c.h.b16 %v119
    %v449 = vpack.c.b16 %v253, %v249
    %v450 = vpack.c.b16 %v254, %v250
    %v451 = vpack.c.b16 %v255, %v251
    %v452 = vpack.c.b16 %v256, %v252
    %v453 = vpack.c.b16 %v261, %v257
    %v454 = vpack.c.b16 %v262, %v258
    %v455 = vpack.c.b16 %v263, %v259
    %v456 = vpack.c.b16 %v264, %v260
    %v457 = vpack.c.b16 %v269, %v265
    %v458 = vpack.c.b16 %v270, %v266
    %v459 = vpack.c.b16 %v271, %v267
    %v460 = vpack.c.b16 %v272, %v268
    %v461 = vpack.c.b16 %v277, %v273
    %v462 = vpack.c.b16 %v278, %v274
    %v463 = vpack.c.b16 %v279, %v275
    %v464 = vpack.c.b16 %v280, %v276
    %v465 = vpack.c.b16 %v285, %v281
    %v466 = vpack.c.b16 %v286, %v282
    %v467 = vpack.c.b16 %v287, %v283
    %v468 = vpack.c.b16 %v288, %v284
    %v469 = vpack.c.b16 %v293, %v289
    %v470 = vpack.c.b16 %v294, %v290
    %v471 = vpack.c.b16 %v295, %v291
    %v472 = vpack.c.b16 %v296, %v292
    %v473 = vpack.c.b16 %v301, %v297
    %v474 = vpack.c.b16 %v302, %v298
    %v475 = vpack.c.b16 %v303, %v299
    %v476 = vpack.c.b16 %v304, %v300
    %v477 = vpack.c.b16 %v309, %v305
    %v478 = vpack.c.b16 %v310, %v306
    %v479 = vpack.c.b16 %v311, %v307
    %v480 = vpack.c.b16 %v312, %v308
    %v481 = vpack.c.b16 %v317, %v313
    %v482 = vpack.c.b16 %v318, %v314
    %v483 = vpack.c.b16 %v319, %v315
    %v484 = vpack.c.b16 %v320, %v316
    %v485 = vpack.c.b16 %v325, %v321
    %v486 = vpack.c.b16 %v326, %v322
    %v487 = vpack.c.b16 %v327, %v323
    %v488 = vpack.c.b16 %v328, %v324
    %v489 = vpack.c.b16 %v333, %v329
    %v490 = vpack.c.b16 %v334, %v330
    %v491 = vpack.c.b16 %v335, %v331
    %v492 = vpack.c.b16 %v336, %v332
    %v493 = vpack.c.b16 %v341, %v337
    %v494 = vpack.c.b16 %v342, %v338
    %v495 = vpack.c.b16 %v343, %v339
    %v496 = vpack.c.b16 %v344, %v340
    %v497 = vpack.c.b16 %v349, %v345
    %v498 = vpack.c.b16 %v350, %v346
    %v499 = vpack.c.b16 %v351, %v347
    %v500 = vpack.c.b16 %v352, %v348
    %v501 = vpack.c.b16 %v357, %v353
    %v502 = vpack.c.b16 %v358, %v354
    %v503 = vpack.c.b16 %v359, %v355
    %v504 = vpack.c.b16 %v360, %v356
    %v505 = vpack.c.b16 %v365, %v361
    %v506 = vpack.c.b16 %v366, %v362
    %v507 = vpack.c.b16 %v367, %v363
    %v508 = vpack.c.b16 %v368, %v364
    %v509 = vpack.c.b16 %v373, %v369
    %v510 = vpack.c.b16 %v374, %v370
    %v511 = vpack.c.b16 %v375, %v371
    %v512 = vpack.c.b16 %v376, %v372
    %v513 = vpack.c.b16 %v381, %v377
    %v514 = vpack.c.b16 %v382, %v378
    %v515 = vpack.c.b16 %v383, %v379
    %v516 = vpack.c.b16 %v384, %v380
    %v517 = vpack.c.b16 %v389, %v385
    %v518 = vpack.c.b16 %v390, %v386
    %v519 = vpack.c.b16 %v391, %v387
    %v520 = vpack.c.b16 %v392, %v388
    %v521 = vpack.c.b16 %v397, %v393
    %v522 = vpack.c.b16 %v398, %v394
    %v523 = vpack.c.b16 %v399, %v395
    %v524 = vpack.c.b16 %v400, %v396
    %v525 = vpack.c.b16 %v405, %v401
    %v526 = vpack.c.b16 %v406, %v402
    %v527 = vpack.c.b16 %v407, %v403
    %v528 = vpack.c.b16 %v408, %v404
    %v529 = vpack.c.b16 %v413, %v409
    %v530 = vpack.c.b16 %v414, %v410
    %v531 = vpack.c.b16 %v415, %v411
    %v532 = vpack.c.b16 %v416, %v412
    %v533 = vpack.c.b16 %v421, %v417
    %v534 = vpack.c.b16 %v422, %v418
    %v535 = vpack.c.b16 %v423, %v419
    %v536 = vpack.c.b16 %v424, %v420
    %v537 = vpack.c.b16 %v429, %v425
    %v538 = vpack.c.b16 %v430, %v426
    %v539 = vpack.c.b16 %v431, %v427
    %v540 = vpack.c.b16 %v432, %v428
    %v541 = vpack.c.b16 %v437, %v433
    %v542 = vpack.c.b16 %v438, %v434
    %v543 = vpack.c.b16 %v439, %v435
    %v544 = vpack.c.b16 %v440, %v436
    %v545 = vpack.c.b16 %v445, %v441
    %v546 = vpack.c.b16 %v446, %v442
    %v547 = vpack.c.b16 %v447, %v443
    %v548 = vpack.c.b16 %v448, %v444
    %vm624 = vcmask 130048
    %v626 = vsel %vm624, %v145, 0
    %v629 = vsel %vm624, %v452, 0
    %v632 = vsel %vm624, %v456, 0
    %v635 = vsel %vm624, %v460, 0
    %v638 = vsel %vm624, %v464, 0
    %v641 = vsel %vm624, %v468, 0
    %v644 = vsel %vm624, %v472, 0
    %v647 = vsel %vm624, %v476, 0
    %v650 = vsel %vm624, %v480, 0
    %v653 = vsel %vm624, %v484, 0
    %v656 = vsel %vm624, %v488, 0
    %v659 = vsel %vm624, %v492, 0
    %v662 = vsel %vm624, %v496, 0
    %v665 = vsel %vm624, %v500, 0
    %v668 = vsel %vm624, %v504, 0
    %v671 = vsel %vm624, %v508, 0
    %v674 = vsel %vm624, %v512, 0
    %v677 = vsel %vm624, %v516, 0
    %v680 = vsel %vm624, %v520, 0
    %v683 = vsel %vm624, %v524, 0
    %v686 = vsel %vm624, %v528, 0
    %v689 = vsel %vm624, %v532, 0
    %v692 = vsel %vm624, %v536, 0
    %v695 = vsel %vm624, %v540, 0
    %v698 = vsel %vm624, %v544, 0
    %v701 = vsel %vm624, %v548, 0
    %703 = vmatpush.bf16.xpose.msra.mxu0 %v477
    %704 = vmatpush.bf16.xpose.msra.mxu0 %v473
    %705 = vmatpush.bf16.xpose.msra.mxu0 %v469
    %706 = vmatpush.bf16.xpose.msra.mxu0 %v465
    %707 = vmatpush.bf16.xpose.msra.mxu0 %v461
    %708 = vmatpush.bf16.xpose.msra.mxu0 %v457
    %709 = vmatpush.bf16.xpose.msra.mxu0 %v453
    %710 = vmatpush.bf16.xpose.msra.mxu0 %v449
    %711 = vmatmul.bf16.gmra.mxu0 %v142
    %v712 = vpop.f32.mrf.mxu0
    %v713 = vadd.f32 %v122, %v712
    %v714 = vpop.f32.mrf.mxu0
    %v715 = vadd.f32 %v122, %v714
    %716 = vdwg.mxu0
    %717 = vmatpush.bf16.xpose.msra.mxu0 %v478
    %718 = vmatpush.bf16.xpose.msra.mxu0 %v474
    %719 = vmatpush.bf16.xpose.msra.mxu0 %v470
    %720 = vmatpush.bf16.xpose.msra.mxu0 %v466
    %721 = vmatpush.bf16.xpose.msra.mxu0 %v462
    %722 = vmatpush.bf16.xpose.msra.mxu0 %v458
    %723 = vmatpush.bf16.xpose.msra.mxu0 %v454
    %724 = vmatpush.bf16.xpose.msra.mxu0 %v450
    %725 = vmatmul.bf16.gmra.mxu0 %v143
    %v726 = vpop.f32.mrf.mxu0
    %v727 = vadd.f32 %v713, %v726
    %v728 = vpop.f32.mrf.mxu0
    %v729 = vadd.f32 %v715, %v728
    %730 = vdwg.mxu0
    %731 = vmatpush.bf16.xpose.msra.mxu0 %v479
    %732 = vmatpush.bf16.xpose.msra.mxu0 %v475
    %733 = vmatpush.bf16.xpose.msra.mxu0 %v471
    %734 = vmatpush.bf16.xpose.msra.mxu0 %v467
    %735 = vmatpush.bf16.xpose.msra.mxu0 %v463
    %736 = vmatpush.bf16.xpose.msra.mxu0 %v459
    %737 = vmatpush.bf16.xpose.msra.mxu0 %v455
    %738 = vmatpush.bf16.xpose.msra.mxu0 %v451
    %739 = vmatmul.bf16.gmra.mxu0 %v144
    %v740 = vpop.f32.mrf.mxu0
    %v741 = vadd.f32 %v727, %v740
    %v742 = vpop.f32.mrf.mxu0
    %v743 = vadd.f32 %v729, %v742
    %744 = vdwg.mxu0
    %745 = vmatpush.bf16.xpose.msra.mxu0 %v650
    %746 = vmatpush.bf16.xpose.msra.mxu0 %v647
    %747 = vmatpush.bf16.xpose.msra.mxu0 %v644
    %748 = vmatpush.bf16.xpose.msra.mxu0 %v641
    %749 = vmatpush.bf16.xpose.msra.mxu0 %v638
    %750 = vmatpush.bf16.xpose.msra.mxu0 %v635
    %751 = vmatpush.bf16.xpose.msra.mxu0 %v632
    %752 = vmatpush.bf16.xpose.msra.mxu0 %v629
    %753 = vmatmul.bf16.gmra.mxu0 %v626
    %v754 = vpop.f32.mrf.mxu0
    %v755 = vadd.f32 %v741, %v754
    %v756 = vpop.f32.mrf.mxu0
    %v757 = vadd.f32 %v743, %v756
    %758 = vdwg.mxu0
    %759 = vmatpush.bf16.xpose.msra.mxu0 %v509
    %760 = vmatpush.bf16.xpose.msra.mxu0 %v505
    %761 = vmatpush.bf16.xpose.msra.mxu0 %v501
    %762 = vmatpush.bf16.xpose.msra.mxu0 %v497
    %763 = vmatpush.bf16.xpose.msra.mxu0 %v493
    %764 = vmatpush.bf16.xpose.msra.mxu0 %v489
    %765 = vmatpush.bf16.xpose.msra.mxu0 %v485
    %766 = vmatpush.bf16.xpose.msra.mxu0 %v481
    %767 = vmatmul.bf16.gmra.mxu0 %v142
    %v768 = vpop.f32.mrf.mxu0
    %v769 = vadd.f32 %v123, %v768
    %v770 = vpop.f32.mrf.mxu0
    %v771 = vadd.f32 %v123, %v770
    %772 = vdwg.mxu0
    %773 = vmatpush.bf16.xpose.msra.mxu0 %v510
    %774 = vmatpush.bf16.xpose.msra.mxu0 %v506
    %775 = vmatpush.bf16.xpose.msra.mxu0 %v502
    %776 = vmatpush.bf16.xpose.msra.mxu0 %v498
    %777 = vmatpush.bf16.xpose.msra.mxu0 %v494
    %778 = vmatpush.bf16.xpose.msra.mxu0 %v490
    %779 = vmatpush.bf16.xpose.msra.mxu0 %v486
    %780 = vmatpush.bf16.xpose.msra.mxu0 %v482
    %781 = vmatmul.bf16.gmra.mxu0 %v143
    %v782 = vpop.f32.mrf.mxu0
    %v783 = vadd.f32 %v769, %v782
    %v784 = vpop.f32.mrf.mxu0
    %v785 = vadd.f32 %v771, %v784
    %786 = vdwg.mxu0
    %787 = vmatpush.bf16.xpose.msra.mxu0 %v511
    %788 = vmatpush.bf16.xpose.msra.mxu0 %v507
    %789 = vmatpush.bf16.xpose.msra.mxu0 %v503
    %790 = vmatpush.bf16.xpose.msra.mxu0 %v499
    %791 = vmatpush.bf16.xpose.msra.mxu0 %v495
    %792 = vmatpush.bf16.xpose.msra.mxu0 %v491
    %793 = vmatpush.bf16.xpose.msra.mxu0 %v487
    %794 = vmatpush.bf16.xpose.msra.mxu0 %v483
    %795 = vmatmul.bf16.gmra.mxu0 %v144
    %v796 = vpop.f32.mrf.mxu0
    %v797 = vadd.f32 %v783, %v796
    %v798 = vpop.f32.mrf.mxu0
    %v799 = vadd.f32 %v785, %v798
    %800 = vdwg.mxu0
    %801 = vmatpush.bf16.xpose.msra.mxu0 %v674
    %802 = vmatpush.bf16.xpose.msra.mxu0 %v671
    %803 = vmatpush.bf16.xpose.msra.mxu0 %v668
    %804 = vmatpush.bf16.xpose.msra.mxu0 %v665
    %805 = vmatpush.bf16.xpose.msra.mxu0 %v662
    %806 = vmatpush.bf16.xpose.msra.mxu0 %v659
    %807 = vmatpush.bf16.xpose.msra.mxu0 %v656
    %808 = vmatpush.bf16.xpose.msra.mxu0 %v653
    %809 = vmatmul.bf16.gmra.mxu0 %v626
    %v810 = vpop.f32.mrf.mxu0
    %v811 = vadd.f32 %v797, %v810
    %v812 = vpop.f32.mrf.mxu0
    %v813 = vadd.f32 %v799, %v812
    %814 = vdwg.mxu0
    %815 = vmatpush.bf16.xpose.msra.mxu0 %v541
    %816 = vmatpush.bf16.xpose.msra.mxu0 %v537
    %817 = vmatpush.bf16.xpose.msra.mxu0 %v533
    %818 = vmatpush.bf16.xpose.msra.mxu0 %v529
    %819 = vmatpush.bf16.xpose.msra.mxu0 %v525
    %820 = vmatpush.bf16.xpose.msra.mxu0 %v521
    %821 = vmatpush.bf16.xpose.msra.mxu0 %v517
    %822 = vmatpush.bf16.xpose.msra.mxu0 %v513
    %823 = vmatmul.bf16.gmra.mxu0 %v142
    %v824 = vpop.f32.mrf.mxu0
    %v825 = vadd.f32 %v124, %v824
    %v826 = vpop.f32.mrf.mxu0
    %v827 = vadd.f32 %v124, %v826
    %828 = vdwg.mxu0
    %829 = vmatpush.bf16.xpose.msra.mxu0 %v542
    %830 = vmatpush.bf16.xpose.msra.mxu0 %v538
    %831 = vmatpush.bf16.xpose.msra.mxu0 %v534
    %832 = vmatpush.bf16.xpose.msra.mxu0 %v530
    %833 = vmatpush.bf16.xpose.msra.mxu0 %v526
    %834 = vmatpush.bf16.xpose.msra.mxu0 %v522
    %835 = vmatpush.bf16.xpose.msra.mxu0 %v518
    %836 = vmatpush.bf16.xpose.msra.mxu0 %v514
    %837 = vmatmul.bf16.gmra.mxu0 %v143
    %v838 = vpop.f32.mrf.mxu0
    %v839 = vadd.f32 %v825, %v838
    %v840 = vpop.f32.mrf.mxu0
    %v841 = vadd.f32 %v827, %v840
    %842 = vdwg.mxu0
    %843 = vmatpush.bf16.xpose.msra.mxu0 %v543
    %844 = vmatpush.bf16.xpose.msra.mxu0 %v539
    %845 = vmatpush.bf16.xpose.msra.mxu0 %v535
    %846 = vmatpush.bf16.xpose.msra.mxu0 %v531
    %847 = vmatpush.bf16.xpose.msra.mxu0 %v527
    %848 = vmatpush.bf16.xpose.msra.mxu0 %v523
    %849 = vmatpush.bf16.xpose.msra.mxu0 %v519
    %850 = vmatpush.bf16.xpose.msra.mxu0 %v515
    %851 = vmatmul.bf16.gmra.mxu0 %v144
    %v852 = vpop.f32.mrf.mxu0
    %v853 = vadd.f32 %v839, %v852
    %v854 = vpop.f32.mrf.mxu0
    %v855 = vadd.f32 %v841, %v854
    %856 = vdwg.mxu0
    %857 = vmatpush.bf16.xpose.msra.mxu0 %v698
    %858 = vmatpush.bf16.xpose.msra.mxu0 %v695
    %859 = vmatpush.bf16.xpose.msra.mxu0 %v692
    %860 = vmatpush.bf16.xpose.msra.mxu0 %v689
    %861 = vmatpush.bf16.xpose.msra.mxu0 %v686
    %862 = vmatpush.bf16.xpose.msra.mxu0 %v683
    %863 = vmatpush.bf16.xpose.msra.mxu0 %v680
    %864 = vmatpush.bf16.xpose.msra.mxu0 %v677
    %865 = vmatmul.bf16.gmra.mxu0 %v626
    %v866 = vpop.f32.mrf.mxu0
    %v867 = vadd.f32 %v853, %v866
    %v868 = vpop.f32.mrf.mxu0
    %v869 = vadd.f32 %v855, %v868
    %870 = vdwg.mxu0
    %871 = vmatpush.bf16.xpose.msra.mxu0 0
    %872 = vmatpush.bf16.xpose.msra.mxu0 0
    %873 = vmatpush.bf16.xpose.msra.mxu0 0
    %874 = vmatpush.bf16.xpose.msra.mxu0 0
    %875 = vmatpush.bf16.xpose.msra.mxu0 0
    %876 = vmatpush.bf16.xpose.msra.mxu0 0
    %877 = vmatpush.bf16.xpose.msra.mxu0 0
    %878 = vmatpush.bf16.xpose.msra.mxu0 %v545
    %879 = vmatmul.bf16.gmra.mxu0 %v142
    %v880 = vpop.f32.mrf.mxu0
    %v881 = vadd.f32 %v125, %v880
    %v882 = vpop.f32.mrf.mxu0
    %v883 = vadd.f32 %v125, %v882
    %884 = vdwg.mxu0
    %885 = vmatpush.bf16.xpose.msra.mxu0 0
    %886 = vmatpush.bf16.xpose.msra.mxu0 0
    %887 = vmatpush.bf16.xpose.msra.mxu0 0
    %888 = vmatpush.bf16.xpose.msra.mxu0 0
    %889 = vmatpush.bf16.xpose.msra.mxu0 0
    %890 = vmatpush.bf16.xpose.msra.mxu0 0
    %891 = vmatpush.bf16.xpose.msra.mxu0 0
    %892 = vmatpush.bf16.xpose.msra.mxu0 %v546
    %893 = vmatmul.bf16.gmra.mxu0 %v143
    %v894 = vpop.f32.mrf.mxu0
    %v895 = vadd.f32 %v881, %v894
    %v896 = vpop.f32.mrf.mxu0
    %v897 = vadd.f32 %v883, %v896
    %898 = vdwg.mxu0
    %899 = vmatpush.bf16.xpose.msra.mxu0 0
    %900 = vmatpush.bf16.xpose.msra.mxu0 0
    %901 = vmatpush.bf16.xpose.msra.mxu0 0
    %902 = vmatpush.bf16.xpose.msra.mxu0 0
    %903 = vmatpush.bf16.xpose.msra.mxu0 0
    %904 = vmatpush.bf16.xpose.msra.mxu0 0
    %905 = vmatpush.bf16.xpose.msra.mxu0 0
    %906 = vmatpush.bf16.xpose.msra.mxu0 %v547
    %907 = vmatmul.bf16.gmra.mxu0 %v144
    %v908 = vpop.f32.mrf.mxu0
    %v909 = vadd.f32 %v895, %v908
    %v910 = vpop.f32.mrf.mxu0
    %v911 = vadd.f32 %v897, %v910
    %912 = vdwg.mxu0
    %913 = vmatpush.bf16.xpose.msra.mxu0 0
    %914 = vmatpush.bf16.xpose.msra.mxu0 0
    %915 = vmatpush.bf16.xpose.msra.mxu0 0
    %916 = vmatpush.bf16.xpose.msra.mxu0 0
    %917 = vmatpush.bf16.xpose.msra.mxu0 0
    %918 = vmatpush.bf16.xpose.msra.mxu0 0
    %919 = vmatpush.bf16.xpose.msra.mxu0 0
    %920 = vmatpush.bf16.xpose.msra.mxu0 %v701
    %921 = vmatmul.bf16.gmra.mxu0 %v626
    %v922 = vpop.f32.mrf.mxu0
    %v923 = vadd.f32 %v909, %v922
    %v924 = vpop.f32.mrf.mxu0
    %v925 = vadd.f32 %v911, %v924
    %926 = vdwg.mxu0
    %927 = vst [vmem:[#allocation2] sm:$0xff] %v755
    %928 = vst [vmem:[#allocation2 + $0x8] sm:$0xff] %v811
    %929 = vst [vmem:[#allocation2 + $0x10] sm:$0xff] %v867
    %930 = vst.msk [vmem:[#allocation2 + $0x18] sm:$0xff] %vm624, %v923
    %931 = vst [vmem:[#allocation2 + $0x20] sm:$0xff] %v757
    %932 = vst [vmem:[#allocation2 + $0x28] sm:$0xff] %v813
    %933 = vst [vmem:[#allocation2 + $0x30] sm:$0xff] %v869
    %934 = vst.msk [vmem:[#allocation2 + $0x38] sm:$0xff] %vm624, %v925
    // Predicated region
    $region14: #{patch_embedding_forward.1} parent=1 // pred_check
      _
    $region15: #{patch_embedding_forward.1} parent=1 // pred_check_branch
      %936 = sbr.rel (0) target = $region17
    $region16: #{patch_embedding_forward.1} parent=1 // pred_region
      %938 = vsyncadd [#allocation3], 0
      %s939 = sshll.u32 [#allocation2], 4
      %s940 = int_to_ptr.vmem [resolvable:$true] %s939
      %s941 = sshll.u32 %s3, 4
      %s942 = int_to_ptr.hbm [resolvable:$true] %s941
      %947 = dma.vmem_to_hbm [thread:$0]  %s940, 1024, %s942, [#allocation3], 512, 512, 32
    $region17: #{patch_embedding_forward.1} parent=1 // pred_fallthru
      _
    // Predicated region
    $region18: #{patch_embedding_forward.1} parent=1 // pred_check
      _
    $region19: #{patch_embedding_forward.1} parent=1 // pred_check_branch
      %949 = sbr.rel (0) target = $region21
    $region20: #{patch_embedding_forward.1} parent=1 // pred_region
      %951 = dma.done [#allocation3], 1024
    $region21: #{patch_embedding_forward.1} parent=1 // pred_fallthru
      _
    %952 = vsyncpa [#allocation3], 1

</llo_original>
